<compile_context>
chip_gen: v7x
topology: tpu7x:2x2x1
jax: 0.10.0
libtpu: 0.0.40
codegen_flags: <defaults>
</compile_context>

<pallas_src>
import functools

import jax
import jax.numpy as jnp
from jax import lax
from jax.experimental import pallas as pl
from jax.experimental.pallas import tpu as pltpu


def _lo_nce_kernel(pred_ref, labels_ref, out_ref, acc_ref, *, n_total, n_tiles):
    # pred_ref:   (TILE_N, C)  input dtype (f32 / bf16)
    # labels_ref: (TILE_N, 1)  int32
    # out_ref:    (1, 1)       f32  (same block every grid step -> VMEM resident)
    # acc_ref:    (1, 1)       f32  VMEM scratch accumulator
    i = pl.program_id(0)

    @pl.when(i == 0)
    def _init():
        acc_ref[...] = jnp.zeros_like(acc_ref)

    x = pred_ref[...].astype(jnp.float32)                    # (TILE_N, C)
    tile_n, c = x.shape

    # Numerically-stable logsumexp pieces (logp itself is never formed).
    m = jnp.max(x, axis=1, keepdims=True)                    # (TILE_N, 1)
    shifted = x - m                                          # (TILE_N, C)
    sumexp = jnp.sum(jnp.exp(shifted), axis=1, keepdims=True)
    lse = jnp.log(sumexp)                                    # (TILE_N, 1)

    # shifted value at the label column via iota-compare select (no gather).
    labels = labels_ref[...]                                 # (TILE_N, 1) int32
    col_ids = lax.broadcasted_iota(jnp.int32, shifted.shape, 1)
    picked = jnp.sum(jnp.where(col_ids == labels, shifted, 0.0),
                     axis=1, keepdims=True)                  # (TILE_N, 1)
    s = jnp.sum(shifted, axis=1, keepdims=True)              # (TILE_N, 1)

    num = lse - picked                                       # -logp[label]
    den = jnp.float32(c) * lse - s                           # -sum(logp)

    # EUP approximate reciprocal + one Newton step (f32-accurate, VPU-cheap).
    r = pl.reciprocal(den, approx=True)
    r = r * (2.0 - den * r)
    nce = num * r                                            # (TILE_N, 1)

    # Mask padded rows (only traced when padding actually exists).
    if n_tiles * tile_n != n_total:
        row_ids = lax.broadcasted_iota(jnp.int32, nce.shape, 0) + i * tile_n
        nce = jnp.where(row_ids < n_total, nce, 0.0)

    acc_ref[...] += jnp.sum(nce, axis=0, keepdims=True)      # (1, 1)

    @pl.when(i == n_tiles - 1)
    def _finalize():
        out_ref[...] = acc_ref[...] / jnp.float32(n_total)


def lo_loss(pred, labels, num_classes, tile_n=None):
    """Pallas equivalent of LO(num_classes, config).forward(pred, labels)."""
    pred = jnp.asarray(pred)                  # keep native dtype (f32 or bf16)
    N, C = pred.shape
    assert C == num_classes, "pred class dim must equal num_classes"
    labels2d = jnp.asarray(labels, jnp.int32).reshape(N, 1)
    itemsize = jnp.dtype(pred.dtype).itemsize

    if tile_n is None:
        # Keep double-buffered input tile well under scoped VMEM on all gens
        # (v7x has only 64 MiB physical / 32 MiB default scoped).
        budget = 8 << 20                       # bytes per buffered input tile
        max_rows = max(8, budget // max(1, 2 * C * itemsize))
        tile_n = min(N, 512, max_rows)
        if tile_n < N:                         # tiled path -> sublane aligned
            tile_n = max(8, (tile_n // 8) * 8)

    n_tiles = pl.cdiv(N, tile_n)
    n_pad = n_tiles * tile_n
    if n_pad != N:
        pred_p = jnp.pad(pred, ((0, n_pad - N), (0, 0)))     # zero rows are safe
        labels_p = jnp.pad(labels2d, ((0, n_pad - N), (0, 0)))
    else:
        pred_p, labels_p = pred, labels2d

    kernel = functools.partial(_lo_nce_kernel, n_total=N, n_tiles=n_tiles)

    cost = pl.CostEstimate(
        flops=6 * N * C,
        transcendentals=N * C,
        bytes_accessed=n_pad * C * itemsize + n_pad * 4 + 4,
    )

    out = pl.pallas_call(
        kernel,
        out_shape=jax.ShapeDtypeStruct((1, 1), jnp.float32),
        grid_spec=pltpu.PrefetchScalarGridSpec(
            num_scalar_prefetch=0,
            grid=(n_tiles,),
            in_specs=[
                pl.BlockSpec((tile_n, C), lambda i: (i, 0)),
                pl.BlockSpec((tile_n, 1), lambda i: (i, 0)),
            ],
            out_specs=pl.BlockSpec((1, 1), lambda i: (0, 0)),
            scratch_shapes=[pltpu.VMEM((1, 1), jnp.float32)],
        ),
        compiler_params=pltpu.CompilerParams(
            dimension_semantics=("arbitrary",),   # batch axis feeds accumulator
        ),
        cost_estimate=cost,
    )(pred_p, labels_p)
    return out[0, 0]


def _reference(pred, labels, num_classes):
    logp = jax.nn.log_softmax(pred.astype(jnp.float32), axis=1)
    onehot = jax.nn.one_hot(labels, num_classes, dtype=jnp.float32)
    nce = -jnp.sum(onehot * logp, axis=1) / (-jnp.sum(logp, axis=1))
    return jnp.mean(nce)


if __name__ == "__main__":
    key = jax.random.PRNGKey(0)

    # Case 1: small, single-tile (batch=8, num_classes=32).
    k1, k2, k3, k4 = jax.random.split(key, 4)
    N, C = 8, 32
    pred = jax.random.normal(k1, (N, C), dtype=jnp.float32)
    labels = jax.random.randint(k2, (N,), 0, C, dtype=jnp.int32)
    out = jax.block_until_ready(lo_loss(pred, labels, C))
    ref = _reference(pred, labels, C)
    assert jnp.allclose(out, ref, atol=1e-4, rtol=1e-4), (out, ref)

    # Case 2: exercises the grid + ragged-tail masking (N=50, tile_n=16).
    N2, C2 = 50, 160
    pred2 = jax.random.normal(k3, (N2, C2), dtype=jnp.float32)
    labels2 = jax.random.randint(k4, (N2,), 0, C2, dtype=jnp.int32)
    out2 = jax.block_until_ready(lo_loss(pred2, labels2, C2, tile_n=16))
    ref2 = _reference(pred2, labels2, C2)
    assert jnp.allclose(out2, ref2, atol=1e-4, rtol=1e-4), (out2, ref2)

    print("KERNEL_OK")
</pallas_src>

<mosaic_0001>
module attributes {stable_mosaic.version = 11 : i64} {
  func.func @_lo_nce_kernel(%arg0: i32, %arg1: memref<8x32xf32, #tpu.memory_space<vmem>>, %arg2: memref<8x1xi32, #tpu.memory_space<vmem>>, %arg3: memref<1x1xf32, #tpu.memory_space<vmem>>, %arg4: memref<1x1xf32, #tpu.memory_space<vmem>>) attributes {dimension_semantics = [#tpu.dimension_semantics<arbitrary>], iteration_bounds = array<i64: 1>, scalar_prefetch = 0 : i64, scratch_operands = 1 : i64, tpu.core_type = #tpu.core_type<tc>, window_params = [{transform_indices = @transform_0, window_bounds = array<i64: 8, 32>}, {transform_indices = @transform_1, window_bounds = array<i64: 8, 1>}, {pipeline_mode = #tpu.pipeline_mode<synchronous>, transform_indices = @transform_2, window_bounds = array<i64: 1, 1>}]} {
    %c0_i32 = arith.constant 0 : i32
    %0 = arith.cmpi eq, %arg0, %c0_i32 : i32
    %1 = arith.extui %0 : i1 to i32
    %c0_i32_0 = arith.constant 0 : i32
    %2 = arith.cmpi ne, %1, %c0_i32_0 : i32
    scf.if %2 {
      %cst_17 = arith.constant 0.000000e+00 : f32
      %40 = vector.broadcast %cst_17 : f32 to vector<1x1xf32>
      %c0_18 = arith.constant 0 : index
      %c0_19 = arith.constant 0 : index
      %41 = vector.load %arg4[%c0_18, %c0_19] : memref<1x1xf32, #tpu.memory_space<vmem>>, vector<1x1xf32>
      tpu.vector_store %arg4[%c0_18, %c0_19], %40 {strides = array<i32>} : memref<1x1xf32, #tpu.memory_space<vmem>>, vector<1x1xf32>,
    } else {
    }
    %c0 = arith.constant 0 : index
    %c0_1 = arith.constant 0 : index
    %3 = vector.load %arg1[%c0, %c0_1] : memref<8x32xf32, #tpu.memory_space<vmem>>, vector<8x32xf32>
    %cst = arith.constant dense<0xFF800000> : vector<8xf32>
    %4 = vector.multi_reduction <maximumf>, %3, %cst [1] : vector<8x32xf32> to vector<8xf32>
    %5 = vector.shape_cast %4 : vector<8xf32> to vector<8x1xf32>
    %6 = vector.broadcast %5 : vector<8x1xf32> to vector<8x32xf32>
    %7 = arith.subf %3, %6 : vector<8x32xf32>
    %8 = math.exp %7 : vector<8x32xf32>
    %cst_2 = arith.constant dense<0.000000e+00> : vector<8xf32>
    %9 = vector.multi_reduction <add>, %8, %cst_2 [1] : vector<8x32xf32> to vector<8xf32>
    %10 = vector.shape_cast %9 : vector<8xf32> to vector<8x1xf32>
    %11 = math.log %10 : vector<8x1xf32>
    %c0_3 = arith.constant 0 : index
    %c0_4 = arith.constant 0 : index
    %12 = vector.load %arg2[%c0_3, %c0_4] : memref<8x1xi32, #tpu.memory_space<vmem>>, vector<8x1xi32>
    %13 = tpu.iota {dimensions = array<i32: 1>} : vector<8x32xi32>
    %14 = vector.broadcast %12 : vector<8x1xi32> to vector<8x32xi32>
    %15 = arith.cmpi eq, %13, %14 : vector<8x32xi32>
    %cst_5 = arith.constant 0.000000e+00 : f32
    %16 = vector.broadcast %cst_5 : f32 to vector<8x32xf32>
    %17 = arith.select %15, %7, %16 : vector<8x32xi1>, vector<8x32xf32>
    %cst_6 = arith.constant dense<0.000000e+00> : vector<8xf32>
    %18 = vector.multi_reduction <add>, %17, %cst_6 [1] : vector<8x32xf32> to vector<8xf32>
    %19 = vector.shape_cast %18 : vector<8xf32> to vector<8x1xf32>
    %cst_7 = arith.constant dense<0.000000e+00> : vector<8xf32>
    %20 = vector.multi_reduction <add>, %7, %cst_7 [1] : vector<8x32xf32> to vector<8xf32>
    %21 = vector.shape_cast %20 : vector<8xf32> to vector<8x1xf32>
    %22 = arith.subf %11, %19 : vector<8x1xf32>
    %cst_8 = arith.constant 3.200000e+01 : f32
    %23 = vector.broadcast %cst_8 : f32 to vector<8x1xf32>
    %24 = arith.mulf %23, %11 : vector<8x1xf32>
    %25 = arith.subf %24, %21 : vector<8x1xf32>
    %26 = tpu.reciprocal %25 {approx = true} : vector<8x1xf32> -> vector<8x1xf32>
    %27 = arith.mulf %25, %26 : vector<8x1xf32>
    %cst_9 = arith.constant 2.000000e+00 : f32
    %28 = vector.broadcast %cst_9 : f32 to vector<8x1xf32>
    %29 = arith.subf %28, %27 : vector<8x1xf32>
    %30 = arith.mulf %26, %29 : vector<8x1xf32>
    %31 = arith.mulf %22, %30 : vector<8x1xf32>
    %c0_10 = arith.constant 0 : index
    %c0_11 = arith.constant 0 : index
    %32 = vector.load %arg4[%c0_10, %c0_11] : memref<1x1xf32, #tpu.memory_space<vmem>>, vector<1x1xf32>
    %cst_12 = arith.constant dense<0.000000e+00> : vector<1xf32>
    %33 = vector.multi_reduction <add>, %31, %cst_12 [0] : vector<8x1xf32> to vector<1xf32>
    %34 = vector.shape_cast %33 : vector<1xf32> to vector<1x1xf32>
    %35 = arith.addf %32, %34 : vector<1x1xf32>
    %c0_13 = arith.constant 0 : index
    %c0_14 = arith.constant 0 : index
    %36 = vector.load %arg4[%c0_13, %c0_14] : memref<1x1xf32, #tpu.memory_space<vmem>>, vector<1x1xf32>
    tpu.vector_store %arg4[%c0_13, %c0_14], %35 {strides = array<i32>} : memref<1x1xf32, #tpu.memory_space<vmem>>, vector<1x1xf32>,
    %c0_i32_15 = arith.constant 0 : i32
    %37 = arith.cmpi eq, %arg0, %c0_i32_15 : i32
    %38 = arith.extui %37 : i1 to i32
    %c0_i32_16 = arith.constant 0 : i32
    %39 = arith.cmpi ne, %38, %c0_i32_16 : i32
    scf.if %39 {
      %c0_17 = arith.constant 0 : index
      %c0_18 = arith.constant 0 : index
      %40 = vector.load %arg4[%c0_17, %c0_18] : memref<1x1xf32, #tpu.memory_space<vmem>>, vector<1x1xf32>
      %cst_19 = arith.constant 8.000000e+00 : f32
      %41 = vector.broadcast %cst_19 : f32 to vector<1x1xf32>
      %42 = arith.divf %40, %41 : vector<1x1xf32>
      %c0_20 = arith.constant 0 : index
      %c0_21 = arith.constant 0 : index
      %43 = vector.load %arg3[%c0_20, %c0_21] : memref<1x1xf32, #tpu.memory_space<vmem>>, vector<1x1xf32>
      tpu.vector_store %arg3[%c0_20, %c0_21], %42 {strides = array<i32>} : memref<1x1xf32, #tpu.memory_space<vmem>>, vector<1x1xf32>,
    } else {
    }
    return
  }
  func.func @transform_0(%arg0: i32) -> (i32, i32) {
    %c0_i32 = arith.constant 0 : i32
    %c0_i32_0 = arith.constant 0 : i32
    return %arg0, %c0_i32 : i32, i32
  }
  func.func @transform_1(%arg0: i32) -> (i32, i32) {
    %c0_i32 = arith.constant 0 : i32
    %c0_i32_0 = arith.constant 0 : i32
    return %arg0, %c0_i32 : i32, i32
  }
  func.func @transform_2(%arg0: i32) -> (i32, i32) {
    %c0_i32 = arith.constant 0 : i32
    %c0_i32_0 = arith.constant 0 : i32
    %c0_i32_1 = arith.constant 0 : i32
    return %c0_i32, %c0_i32_0 : i32, i32
  }
}

</mosaic_0001>

<llo_original>
// kernel: tpu_custom_call.1
$region0: #{tpu_custom_call.1}
  #allocation0 [shape = 'u32[]', space=smem, size = 0x4, offset = 0x4, fixed_abs, tag = 'smem constant byte address 0x4 - core index']
  #allocation1 [shape = 'u32[144,128]{1,0:T(1,128)}', space=vmem, size = 0x12000, scoped, tag = 'internal scratch']
  #allocation2 [shape = 'f32[1,1]{1,0:T(1,128)}', space=vmem, size = 0x200, scoped, tag = 'scratch operand']
  %s0 = inlined_call_operand.vmem [shape: f32[8,32], index: 0, kind: input, shape index: {}]
  %s1 = inlined_call_operand.vmem [shape: s32[8,1], index: 1, kind: input, shape index: {}]
  %s2 = inlined_call_operand.hbm [shape: f32[1,1], index: 2, kind: output, shape index: {}]
  %s3 = sld [smem:[#allocation0]]
  $region26: #{tpu_custom_call.1} parent=0
    _
  %s5 = ssub.s32 1, %s3
  %s6 = scalar_select 0, %s5, %s3
  $region1: #{tpu_custom_call.1} parent=0
    #allocation3 [shape = 'u8[512]{0}', space=vmem, size = 0x400, scoped, tag = 'output window, operand 0, single buffered']
    #allocation4 [shape = 's32[1]{0}', space=sflag, size = 0x4, scoped, tag = 'scoped memory for tpu_custom_call.1']
    %7 = vsyncpa [#allocation4], 0
    // Predicated region
    $region2: #{tpu_custom_call.1} parent=1 // pred_check
      _
    $region3: #{tpu_custom_call.1} parent=1 // pred_check_branch
      %9 = sbr.rel (0) target = $region5
    $region4: #{tpu_custom_call.1} parent=1 // pred_region
      _
    $region5: #{tpu_custom_call.1} parent=1 // pred_fallthru
      _
    // Predicated region
    $region6: #{tpu_custom_call.1} parent=1 // pred_check
      _
    $region7: #{tpu_custom_call.1} parent=1 // pred_check_branch
      %11 = sbr.rel (0) target = $region9
    $region8: #{tpu_custom_call.1} parent=1 // pred_region
      _
    $region9: #{tpu_custom_call.1} parent=1 // pred_fallthru
      _
    %p12 = scmp.eq.s32.totalorder 0, 0
    // Predicated region
    $region10: #{tpu_custom_call.1} parent=1 // pred_check
      %p13 = pneg %p12
    $region11: #{tpu_custom_call.1} parent=1 // pred_check_branch
      %15 = sbr.rel (%p13) target = $region13
    $region12: #{tpu_custom_call.1} parent=1 // pred_region
      %vm16 = vcmask 0
      %17 = vst.msk [vmem:[#allocation2] sm:$0x1] %vm16, 0.0
    $region13: #{tpu_custom_call.1} parent=1 // pred_fallthru
      _
    %v18 = vld [vmem:[%s0] sm:$0xff]
    %vm19 = vcmask 261120
    %v20 = vsel %vm19, %v18, -inf
    %21 = vmax.xlane.f32.xlu0 %v20
    %v22 = vpop.xlane.xlu0 %21
    %v23 = vsub.f32 %v18, %v22
    %v24 = vmul.f32 %v23, 1.442695
    %v25 = vpow.pop %v24
    %v26 = vsel %vm19, %v25, 0.0
    %27 = vadd.xlane.f32.xlu0 %v26
    %v28 = vpop.xlane.xlu0 %27
    %v29 = vlog2.pop %v28
    %v30 = vmul.f32 %v29, 0.6931472
    %v31 = vld [vmem:[%s1] sm:$0xff]
    %v32 = vlaneseq
    %v33 = vand.u32 %v32, 127
    %34 = vset.pattern.permute.xlu0 0
    %35 = vperm.xlu0 %34, %v31
    %v36 = vpop.permute.xlu0 %35
    %vm37 = vcmp.eq.s32.totalorder %v33, %v36
    %v38 = vsel %vm37, %v23, 0.0
    %v39 = vsel %vm19, %v38, 0.0
    %40 = vadd.xlane.f32.xlu0 %v39
    %v41 = vpop.xlane.xlu0 %40
    %v42 = vsel %vm19, %v23, 0.0
    %43 = vadd.xlane.f32.xlu0 %v42
    %v44 = vpop.xlane.xlu0 %43
    %v45 = vsub.f32 %v30, %v41
    %v46 = vmul.f32 %v30, 32.0
    %v47 = vsub.f32 %v46, %v44
    %v48 = vrcp.pop %v47
    %v49 = vmul.f32 %v47, %v48
    %v50 = vsub.f32 2.0, %v49
    %v51 = vmul.f32 %v48, %v50
    %v52 = vmul.f32 %v45, %v51
    %v53 = vld [vmem:[#allocation2] sm:$0x1]
    %v54 = vrot.slane %v52, 4
    %v55 = vadd.f32 %v52, %v54
    %v56 = vrot.slane %v55, 2
    %v57 = vadd.f32 %v55, %v56
    %v58 = vrot.slane %v57, 1
    %v59 = vadd.f32 %v57, %v58
    %v60 = vadd.f32 %v53, %v59
    %vm61 = vcmask 0
    %62 = vst.msk [vmem:[#allocation2] sm:$0x1] %vm61, %v60
    // Predicated region
    $region14: #{tpu_custom_call.1} parent=1 // pred_check
      %p63 = pneg %p12
    $region15: #{tpu_custom_call.1} parent=1 // pred_check_branch
      %65 = sbr.rel (%p63) target = $region17
    $region16: #{tpu_custom_call.1} parent=1 // pred_region
      %v66 = vld [vmem:[#allocation2] sm:$0x1]
      %v67 = vrcp.pop 8.0
      %v68 = vmul.f32 %v66, %v67
      %69 = vst.msk [vmem:[#allocation3] sm:$0x1] %vm61, %v68
    $region17: #{tpu_custom_call.1} parent=1 // pred_fallthru
      _
    // Predicated region
    $region18: #{tpu_custom_call.1} parent=1 // pred_check
      _
    $region19: #{tpu_custom_call.1} parent=1 // pred_check_branch
      %71 = sbr.rel (0) target = $region21
    $region20: #{tpu_custom_call.1} parent=1 // pred_region
      %s73 = ssub.s32 16, 16
      %74 = vsyncadd [#allocation4], %s73
      %s76 = sshll.u32 [#allocation3], 4
      %s77 = int_to_ptr.vmem [resolvable:$true] %s76
      %79 = dma.vmem_to_hbm [thread:$0]  %s77, 16, %s2, [#allocation4]
    $region21: #{tpu_custom_call.1} parent=1 // pred_fallthru
      _
    // Predicated region
    $region22: #{tpu_custom_call.1} parent=1 // pred_check
      _
    $region23: #{tpu_custom_call.1} parent=1 // pred_check_branch
      %81 = sbr.rel (0) target = $region25
    $region24: #{tpu_custom_call.1} parent=1 // pred_region
      %82 = dma.done [#allocation4], 16
    $region25: #{tpu_custom_call.1} parent=1 // pred_fallthru
      _
    %83 = vsyncpa [#allocation4], 1

</llo_original>
